<compile_context>
chip_gen: v6e
topology: v6e:2x2x1
jax: 0.10.0
libtpu: 0.0.40
codegen_flags: <defaults>
</compile_context>

<pallas_src>
import functools

import jax
import jax.numpy as jnp
from jax.experimental import pallas as pl
from jax.experimental.pallas import tpu as pltpu


def cnn_kernel(x_ref, w_ref, b_ref, o_ref):
    # x_ref: (L_out, BT, K*C)   im2col windows, time-major
    # w_ref: (K*C, F)           flattened conv weight (resident across grid)
    # b_ref: (1, F)             bias row (f32, lane-major)
    # o_ref: (BT, F)            pooled output for this batch tile (lane-dense)
    w = w_ref[...]
    L_out = x_ref.shape[0]

    # max_t relu(conv_t + b) == relu(max_t conv_t + b) since ReLU and +bias are
    # monotone, so the bias add + ReLU is hoisted out of the time loop.
    best = jnp.dot(x_ref[0], w, preferred_element_type=jnp.float32)        # (BT, F)
    for t in range(1, L_out):                                              # static unroll
        conv_t = jnp.dot(x_ref[t], w, preferred_element_type=jnp.float32)  # MXU
        best = jnp.maximum(best, conv_t)                                   # VPU running max

    best = jnp.maximum(best + b_ref[...], 0.0)                             # bias + ReLU (f32)
    o_ref[...] = best.astype(o_ref.dtype)


def _pick_block_b(B, L_out, KC, itemsize):
    # One x block is (L_out, BT, K*C) and is double-buffered by the pipeline.
    # Budget ~8 MiB per buffer so 2x fits comfortably inside v7x's 32 MiB
    # default scoped VMEM alongside the resident weight / output blocks.
    budget_bytes = 8 * 1024 * 1024
    per_sample = max(1, L_out * KC * itemsize)
    bt = budget_bytes // per_sample
    bt = max(8, min(512, bt))
    bt = (bt // 8) * 8
    if bt >= B:
        return B
    return bt


@functools.partial(jax.jit, static_argnames=("block_b", "compute_dtype"))
def cnn_forward(x, weight, bias, *, block_b=None, compute_dtype=jnp.float32):
    """x: (B, C, L) f32; weight: (F, C, K); bias: (F,). Returns (B, F)."""
    B, C, L = x.shape
    F, _, K = weight.shape
    L_out = L - K + 1
    KC = K * C

    # Time-major im2col (plain XLA, outside the kernel):
    #   xcol[t, b, k*C + c] = x[b, c, t + k]
    x_lbc = jnp.transpose(x, (2, 0, 1))                                       # (L, B, C)
    xcol = jnp.concatenate([x_lbc[k:k + L_out] for k in range(K)], axis=-1)   # (L_out, B, K*C)
    # Matching flattened weight:  w2[k*C + c, f] = weight[f, c, k]
    w2 = jnp.transpose(weight, (2, 1, 0)).reshape(KC, F)                      # (K*C, F)
    b_row = bias.astype(jnp.float32).reshape(1, F)                            # (1, F)

    itemsize = jnp.dtype(compute_dtype).itemsize
    bt = block_b if block_b is not None else _pick_block_b(B, L_out, KC, itemsize)
    bt = min(bt, B)
    if bt != B and bt % 8 != 0:          # block rows must be %8 or the full dim
        bt = min(B, max(8, (bt // 8) * 8))
    grid = (pl.cdiv(B, bt),)

    cost = pl.CostEstimate(
        flops=int(2 * B * L_out * KC * F),
        transcendentals=0,
        bytes_accessed=int(xcol.size * itemsize + KC * F * itemsize
                           + B * F * x.dtype.itemsize),
    )

    return pl.pallas_call(
        cnn_kernel,
        out_shape=jax.ShapeDtypeStruct((B, F), x.dtype),
        grid_spec=pltpu.PrefetchScalarGridSpec(
            num_scalar_prefetch=0,
            grid=grid,
            in_specs=[
                pl.BlockSpec((L_out, bt, KC), lambda i: (0, i, 0)),   # batch-tiled im2col
                pl.BlockSpec((KC, F), lambda i: (0, 0)),              # resident weight
                pl.BlockSpec((1, F), lambda i: (0, 0)),               # bias row
            ],
            out_specs=pl.BlockSpec((bt, F), lambda i: (i, 0)),        # lane-dense (BT, F)
        ),
        compiler_params=pltpu.CompilerParams(
            dimension_semantics=("parallel",)),                       # megacore tile split
        cost_estimate=cost,
    )(xcol.astype(compute_dtype), w2.astype(compute_dtype), b_row)


def cnn_forward_ref(x, weight, bias):
    """Pure-JAX reference matching PyTorch semantics."""
    F, C, K = weight.shape
    L_out = x.shape[-1] - K + 1
    conv = sum(
        jnp.einsum("bcl,fc->bfl", x[:, :, k:k + L_out], weight[:, :, k])
        for k in range(K)
    )
    conv = conv + bias[None, :, None]
    return jnp.max(jax.nn.relu(conv), axis=-1)


if __name__ == "__main__":
    # Small, deterministic setup consistent with the module:
    # x_reshaped: (batch, char_embed_dim, seq_len)
    batch, char_embed_dim, num_filters, seq_len, K = 2, 4, 8, 16, 5

    key = jax.random.PRNGKey(0)
    kx, kw, kb, kx2 = jax.random.split(key, 4)

    x = jax.random.normal(kx, (batch, char_embed_dim, seq_len), dtype=jnp.float32)

    # Deterministic param init (PyTorch Conv1d default: U(-s, s), s = 1/sqrt(C*K))
    fan_in = char_embed_dim * K
    s = 1.0 / (fan_in ** 0.5)
    weight = jax.random.uniform(kw, (num_filters, char_embed_dim, K),
                                minval=-s, maxval=s, dtype=jnp.float32)
    bias = jax.random.uniform(kb, (num_filters,),
                              minval=-s, maxval=s, dtype=jnp.float32)

    # f32 path (tight check)
    out = jax.block_until_ready(cnn_forward(x, weight, bias))
    ref = cnn_forward_ref(x, weight, bias)
    assert out.shape == (batch, num_filters)
    assert jnp.allclose(out, ref, atol=1e-4, rtol=1e-4), "f32 mismatch vs reference"

    # bf16 matmul operands, f32 accumulation/epilogue (loose check)
    out_bf16 = jax.block_until_ready(
        cnn_forward(x, weight, bias, compute_dtype=jnp.bfloat16))
    assert jnp.allclose(out_bf16, ref, atol=1e-1, rtol=1e-1), "bf16 mismatch vs reference"

    # Multi-tile batch (grid > 1, resident weight, lane-dense stores)
    B2 = 24
    x2 = jax.random.normal(kx2, (B2, char_embed_dim, seq_len), dtype=jnp.float32)
    out2 = jax.block_until_ready(cnn_forward(x2, weight, bias, block_b=8))
    ref2 = cnn_forward_ref(x2, weight, bias)
    assert out2.shape == (B2, num_filters)
    assert jnp.allclose(out2, ref2, atol=1e-4, rtol=1e-4), "tiled mismatch vs reference"

    print("KERNEL_OK")
</pallas_src>

<mosaic_0001>
module attributes {stable_mosaic.version = 11 : i64} {
  func.func @cnn_kernel(%arg0: i32, %arg1: memref<12x2x20xf32, #tpu.memory_space<vmem>>, %arg2: memref<20x8xf32, #tpu.memory_space<vmem>>, %arg3: memref<1x8xf32, #tpu.memory_space<vmem>>, %arg4: memref<2x8xf32, #tpu.memory_space<vmem>>) attributes {dimension_semantics = [#tpu.dimension_semantics<parallel>], iteration_bounds = array<i64: 1>, scalar_prefetch = 0 : i64, scratch_operands = 0 : i64, tpu.core_type = #tpu.core_type<tc>, window_params = [{transform_indices = @transform_0, window_bounds = array<i64: 12, 2, 20>}, {pipeline_mode = #tpu.pipeline_mode<synchronous>, transform_indices = @transform_1, window_bounds = array<i64: 20, 8>}, {pipeline_mode = #tpu.pipeline_mode<synchronous>, transform_indices = @transform_2, window_bounds = array<i64: 1, 8>}, {transform_indices = @transform_3, window_bounds = array<i64: 2, 8>}]} {
    %c0 = arith.constant 0 : index
    %c0_0 = arith.constant 0 : index
    %0 = vector.load %arg2[%c0, %c0_0] : memref<20x8xf32, #tpu.memory_space<vmem>>, vector<20x8xf32>
    %c0_1 = arith.constant 0 : index
    %c0_2 = arith.constant 0 : index
    %c0_3 = arith.constant 0 : index
    %1 = vector.load %arg1[%c0_1, %c0_2, %c0_3] : memref<12x2x20xf32, #tpu.memory_space<vmem>>, vector<1x2x20xf32>
    %2 = vector.shape_cast %1 : vector<1x2x20xf32> to vector<2x20xf32>
    %cst = arith.constant dense<0.000000e+00> : vector<2x8xf32>
    %3 = tpu.matmul %2, %0, %cst {dimension_numbers = #tpu.dot_dimension_numbers<[1], [0], [0], [1], [0, 0, 1, 1], [], []>} : vector<2x20xf32>, vector<20x8xf32>, vector<2x8xf32> -> vector<2x8xf32>
    %c1 = arith.constant 1 : index
    %c0_4 = arith.constant 0 : index
    %c0_5 = arith.constant 0 : index
    %4 = vector.load %arg1[%c1, %c0_4, %c0_5] : memref<12x2x20xf32, #tpu.memory_space<vmem>>, vector<1x2x20xf32>
    %5 = vector.shape_cast %4 : vector<1x2x20xf32> to vector<2x20xf32>
    %cst_6 = arith.constant dense<0.000000e+00> : vector<2x8xf32>
    %6 = tpu.matmul %5, %0, %cst_6 {dimension_numbers = #tpu.dot_dimension_numbers<[1], [0], [0], [1], [0, 0, 1, 1], [], []>} : vector<2x20xf32>, vector<20x8xf32>, vector<2x8xf32> -> vector<2x8xf32>
    %7 = arith.maximumf %3, %6 : vector<2x8xf32>
    %c2 = arith.constant 2 : index
    %c0_7 = arith.constant 0 : index
    %c0_8 = arith.constant 0 : index
    %8 = vector.load %arg1[%c2, %c0_7, %c0_8] : memref<12x2x20xf32, #tpu.memory_space<vmem>>, vector<1x2x20xf32>
    %9 = vector.shape_cast %8 : vector<1x2x20xf32> to vector<2x20xf32>
    %cst_9 = arith.constant dense<0.000000e+00> : vector<2x8xf32>
    %10 = tpu.matmul %9, %0, %cst_9 {dimension_numbers = #tpu.dot_dimension_numbers<[1], [0], [0], [1], [0, 0, 1, 1], [], []>} : vector<2x20xf32>, vector<20x8xf32>, vector<2x8xf32> -> vector<2x8xf32>
    %11 = arith.maximumf %7, %10 : vector<2x8xf32>
    %c3 = arith.constant 3 : index
    %c0_10 = arith.constant 0 : index
    %c0_11 = arith.constant 0 : index
    %12 = vector.load %arg1[%c3, %c0_10, %c0_11] : memref<12x2x20xf32, #tpu.memory_space<vmem>>, vector<1x2x20xf32>
    %13 = vector.shape_cast %12 : vector<1x2x20xf32> to vector<2x20xf32>
    %cst_12 = arith.constant dense<0.000000e+00> : vector<2x8xf32>
    %14 = tpu.matmul %13, %0, %cst_12 {dimension_numbers = #tpu.dot_dimension_numbers<[1], [0], [0], [1], [0, 0, 1, 1], [], []>} : vector<2x20xf32>, vector<20x8xf32>, vector<2x8xf32> -> vector<2x8xf32>
    %15 = arith.maximumf %11, %14 : vector<2x8xf32>
    %c4 = arith.constant 4 : index
    %c0_13 = arith.constant 0 : index
    %c0_14 = arith.constant 0 : index
    %16 = vector.load %arg1[%c4, %c0_13, %c0_14] : memref<12x2x20xf32, #tpu.memory_space<vmem>>, vector<1x2x20xf32>
    %17 = vector.shape_cast %16 : vector<1x2x20xf32> to vector<2x20xf32>
    %cst_15 = arith.constant dense<0.000000e+00> : vector<2x8xf32>
    %18 = tpu.matmul %17, %0, %cst_15 {dimension_numbers = #tpu.dot_dimension_numbers<[1], [0], [0], [1], [0, 0, 1, 1], [], []>} : vector<2x20xf32>, vector<20x8xf32>, vector<2x8xf32> -> vector<2x8xf32>
    %19 = arith.maximumf %15, %18 : vector<2x8xf32>
    %c5 = arith.constant 5 : index
    %c0_16 = arith.constant 0 : index
    %c0_17 = arith.constant 0 : index
    %20 = vector.load %arg1[%c5, %c0_16, %c0_17] : memref<12x2x20xf32, #tpu.memory_space<vmem>>, vector<1x2x20xf32>
    %21 = vector.shape_cast %20 : vector<1x2x20xf32> to vector<2x20xf32>
    %cst_18 = arith.constant dense<0.000000e+00> : vector<2x8xf32>
    %22 = tpu.matmul %21, %0, %cst_18 {dimension_numbers = #tpu.dot_dimension_numbers<[1], [0], [0], [1], [0, 0, 1, 1], [], []>} : vector<2x20xf32>, vector<20x8xf32>, vector<2x8xf32> -> vector<2x8xf32>
    %23 = arith.maximumf %19, %22 : vector<2x8xf32>
    %c6 = arith.constant 6 : index
    %c0_19 = arith.constant 0 : index
    %c0_20 = arith.constant 0 : index
    %24 = vector.load %arg1[%c6, %c0_19, %c0_20] : memref<12x2x20xf32, #tpu.memory_space<vmem>>, vector<1x2x20xf32>
    %25 = vector.shape_cast %24 : vector<1x2x20xf32> to vector<2x20xf32>
    %cst_21 = arith.constant dense<0.000000e+00> : vector<2x8xf32>
    %26 = tpu.matmul %25, %0, %cst_21 {dimension_numbers = #tpu.dot_dimension_numbers<[1], [0], [0], [1], [0, 0, 1, 1], [], []>} : vector<2x20xf32>, vector<20x8xf32>, vector<2x8xf32> -> vector<2x8xf32>
    %27 = arith.maximumf %23, %26 : vector<2x8xf32>
    %c7 = arith.constant 7 : index
    %c0_22 = arith.constant 0 : index
    %c0_23 = arith.constant 0 : index
    %28 = vector.load %arg1[%c7, %c0_22, %c0_23] : memref<12x2x20xf32, #tpu.memory_space<vmem>>, vector<1x2x20xf32>
    %29 = vector.shape_cast %28 : vector<1x2x20xf32> to vector<2x20xf32>
    %cst_24 = arith.constant dense<0.000000e+00> : vector<2x8xf32>
    %30 = tpu.matmul %29, %0, %cst_24 {dimension_numbers = #tpu.dot_dimension_numbers<[1], [0], [0], [1], [0, 0, 1, 1], [], []>} : vector<2x20xf32>, vector<20x8xf32>, vector<2x8xf32> -> vector<2x8xf32>
    %31 = arith.maximumf %27, %30 : vector<2x8xf32>
    %c8 = arith.constant 8 : index
    %c0_25 = arith.constant 0 : index
    %c0_26 = arith.constant 0 : index
    %32 = vector.load %arg1[%c8, %c0_25, %c0_26] : memref<12x2x20xf32, #tpu.memory_space<vmem>>, vector<1x2x20xf32>
    %33 = vector.shape_cast %32 : vector<1x2x20xf32> to vector<2x20xf32>
    %cst_27 = arith.constant dense<0.000000e+00> : vector<2x8xf32>
    %34 = tpu.matmul %33, %0, %cst_27 {dimension_numbers = #tpu.dot_dimension_numbers<[1], [0], [0], [1], [0, 0, 1, 1], [], []>} : vector<2x20xf32>, vector<20x8xf32>, vector<2x8xf32> -> vector<2x8xf32>
    %35 = arith.maximumf %31, %34 : vector<2x8xf32>
    %c9 = arith.constant 9 : index
    %c0_28 = arith.constant 0 : index
    %c0_29 = arith.constant 0 : index
    %36 = vector.load %arg1[%c9, %c0_28, %c0_29] : memref<12x2x20xf32, #tpu.memory_space<vmem>>, vector<1x2x20xf32>
    %37 = vector.shape_cast %36 : vector<1x2x20xf32> to vector<2x20xf32>
    %cst_30 = arith.constant dense<0.000000e+00> : vector<2x8xf32>
    %38 = tpu.matmul %37, %0, %cst_30 {dimension_numbers = #tpu.dot_dimension_numbers<[1], [0], [0], [1], [0, 0, 1, 1], [], []>} : vector<2x20xf32>, vector<20x8xf32>, vector<2x8xf32> -> vector<2x8xf32>
    %39 = arith.maximumf %35, %38 : vector<2x8xf32>
    %c10 = arith.constant 10 : index
    %c0_31 = arith.constant 0 : index
    %c0_32 = arith.constant 0 : index
    %40 = vector.load %arg1[%c10, %c0_31, %c0_32] : memref<12x2x20xf32, #tpu.memory_space<vmem>>, vector<1x2x20xf32>
    %41 = vector.shape_cast %40 : vector<1x2x20xf32> to vector<2x20xf32>
    %cst_33 = arith.constant dense<0.000000e+00> : vector<2x8xf32>
    %42 = tpu.matmul %41, %0, %cst_33 {dimension_numbers = #tpu.dot_dimension_numbers<[1], [0], [0], [1], [0, 0, 1, 1], [], []>} : vector<2x20xf32>, vector<20x8xf32>, vector<2x8xf32> -> vector<2x8xf32>
    %43 = arith.maximumf %39, %42 : vector<2x8xf32>
    %c11 = arith.constant 11 : index
    %c0_34 = arith.constant 0 : index
    %c0_35 = arith.constant 0 : index
    %44 = vector.load %arg1[%c11, %c0_34, %c0_35] : memref<12x2x20xf32, #tpu.memory_space<vmem>>, vector<1x2x20xf32>
    %45 = vector.shape_cast %44 : vector<1x2x20xf32> to vector<2x20xf32>
    %cst_36 = arith.constant dense<0.000000e+00> : vector<2x8xf32>
    %46 = tpu.matmul %45, %0, %cst_36 {dimension_numbers = #tpu.dot_dimension_numbers<[1], [0], [0], [1], [0, 0, 1, 1], [], []>} : vector<2x20xf32>, vector<20x8xf32>, vector<2x8xf32> -> vector<2x8xf32>
    %47 = arith.maximumf %43, %46 : vector<2x8xf32>
    %c0_37 = arith.constant 0 : index
    %c0_38 = arith.constant 0 : index
    %48 = vector.load %arg3[%c0_37, %c0_38] : memref<1x8xf32, #tpu.memory_space<vmem>>, vector<1x8xf32>
    %49 = vector.broadcast %48 : vector<1x8xf32> to vector<2x8xf32>
    %50 = arith.addf %47, %49 : vector<2x8xf32>
    %cst_39 = arith.constant 0.000000e+00 : f32
    %51 = vector.broadcast %cst_39 : f32 to vector<2x8xf32>
    %52 = arith.maximumf %50, %51 : vector<2x8xf32>
    %c0_40 = arith.constant 0 : index
    %c0_41 = arith.constant 0 : index
    %53 = vector.load %arg4[%c0_40, %c0_41] : memref<2x8xf32, #tpu.memory_space<vmem>>, vector<2x8xf32>
    tpu.vector_store %arg4[%c0_40, %c0_41], %52 {strides = array<i32>} : memref<2x8xf32, #tpu.memory_space<vmem>>, vector<2x8xf32>,
    return
  }
  func.func @transform_0(%arg0: i32) -> (i32, i32, i32) {
    %c0_i32 = arith.constant 0 : i32
    %c0_i32_0 = arith.constant 0 : i32
    %c0_i32_1 = arith.constant 0 : i32
    return %c0_i32, %arg0, %c0_i32_0 : i32, i32, i32
  }
  func.func @transform_1(%arg0: i32) -> (i32, i32) {
    %c0_i32 = arith.constant 0 : i32
    %c0_i32_0 = arith.constant 0 : i32
    %c0_i32_1 = arith.constant 0 : i32
    return %c0_i32, %c0_i32_0 : i32, i32
  }
  func.func @transform_2(%arg0: i32) -> (i32, i32) {
    %c0_i32 = arith.constant 0 : i32
    %c0_i32_0 = arith.constant 0 : i32
    %c0_i32_1 = arith.constant 0 : i32
    return %c0_i32, %c0_i32_0 : i32, i32
  }
  func.func @transform_3(%arg0: i32) -> (i32, i32) {
    %c0_i32 = arith.constant 0 : i32
    %c0_i32_0 = arith.constant 0 : i32
    return %arg0, %c0_i32 : i32, i32
  }
}

</mosaic_0001>

<llo_original>
// kernel: cnn_forward.1
$region0: #{cnn_forward.1}
  #allocation0 [shape = 'u32[]', space=smem, size = 0x4, offset = 0x4, fixed_abs, tag = 'smem constant byte address 0x4 - core index']
  #allocation1 [shape = 'u32[144,128]{1,0:T(1,128)}', space=vmem, size = 0x12000, scoped, tag = 'internal scratch']
  %s0 = inlined_call_operand.vmem [shape: f32[12,2,20], index: 0, kind: input, shape index: {}]
  %s1 = inlined_call_operand.vmem [shape: f32[20,8], index: 1, kind: input, shape index: {}]
  %s2 = inlined_call_operand.vmem [shape: f32[1,8], index: 2, kind: input, shape index: {}]
  %s3 = inlined_call_operand.hbm [shape: f32[2,8], index: 3, kind: output, shape index: {}]
  %s4 = sld [smem:[#allocation0]]
  $region22: #{cnn_forward.1} parent=0
    _
  %s6 = ssub.s32 1, %s4
  %s7 = scalar_select 0, %s6, %s4
  $region1: #{cnn_forward.1} parent=0
    #allocation2 [shape = 'u8[1024]{0}', space=vmem, size = 0x400, scoped, tag = 'output window, operand 0, single buffered']
    #allocation3 [shape = 's32[1]{0}', space=sflag, size = 0x4, scoped, tag = 'scoped memory for cnn_forward.1']
    %8 = vsyncpa [#allocation3], 0
    // Predicated region
    $region2: #{cnn_forward.1} parent=1 // pred_check
      _
    $region3: #{cnn_forward.1} parent=1 // pred_check_branch
      %10 = sbr.rel (0) target = $region5
    $region4: #{cnn_forward.1} parent=1 // pred_region
      _
    $region5: #{cnn_forward.1} parent=1 // pred_fallthru
      _
    // Predicated region
    $region6: #{cnn_forward.1} parent=1 // pred_check
      _
    $region7: #{cnn_forward.1} parent=1 // pred_check_branch
      %12 = sbr.rel (0) target = $region9
    $region8: #{cnn_forward.1} parent=1 // pred_region
      _
    $region9: #{cnn_forward.1} parent=1 // pred_fallthru
      _
    // Predicated region
    $region10: #{cnn_forward.1} parent=1 // pred_check
      _
    $region11: #{cnn_forward.1} parent=1 // pred_check_branch
      %14 = sbr.rel (0) target = $region13
    $region12: #{cnn_forward.1} parent=1 // pred_region
      _
    $region13: #{cnn_forward.1} parent=1 // pred_fallthru
      _
    %v15 = vld [vmem:[%s1] sm:$0xff]
    %v16 = vld [vmem:[%s1 + $0x8] sm:$0xff]
    %v17 = vld [vmem:[%s1 + $0x10] sm:$0xf]
    %v18 = vld [vmem:[%s0] sm:$0x3]
    %vm19 = vcmask 162816
    %v21 = vsel %vm19, %v18, 0
    %vm23 = vcmask 1043456
    %v25 = vsel %vm23, %v17, 0
    %27 = vmatprep.subr.mxu0 0.0
    %28 = vmatpush1.msra.mxu0 0.0
    %29 = vmatprep.subr.mxu0 0.0
    %30 = vmatpush1.msra.mxu0 0.0
    %31 = vmatprep.subr.mxu0 0.0
    %32 = vmatpush1.msra.mxu0 0.0
    %33 = vmatprep.subr.mxu0 0.0
    %34 = vmatpush1.msra.mxu0 0.0
    %35 = vmatprep.subr.mxu0 0.0
    %36 = vmatpush1.msra.mxu0 0.0
    %37 = vmatprep.subr.mxu0 0.0
    %38 = vmatpush1.msra.mxu0 0.0
    %39 = vmatprep.subr.mxu0 0.0
    %40 = vmatpush1.msra.mxu0 0.0
    %41 = vmatprep.subr.mxu0 0.0
    %42 = vmatpush1.msra.mxu0 0.0
    %43 = vmatprep.subr.mxu0 0.0
    %44 = vmatpush1.msra.mxu0 0.0
    %45 = vmatprep.subr.mxu0 0.0
    %46 = vmatpush1.msra.mxu0 0.0
    %47 = vmatprep.subr.mxu0 0.0
    %48 = vmatpush1.msra.mxu0 0.0
    %49 = vmatprep.subr.mxu0 0.0
    %50 = vmatpush1.msra.mxu0 0.0
    %51 = vmatprep.subr.mxu0 0.0
    %52 = vmatpush1.msra.mxu0 0.0
    %53 = vmatprep.subr.mxu0 0.0
    %54 = vmatpush1.msra.mxu0 %v25
    %55 = vmatprep.subr.mxu0 0.0
    %56 = vmatpush1.msra.mxu0 %v16
    %57 = vmatprep.subr.mxu0 0.0
    %58 = vmatpush1.msra.mxu0 %v15
    %59 = vmatprep.subr.mxu0 0.0
    %60 = vmatpush2.msra.mxu0 0.0
    %61 = vmatprep.subr.mxu0 0.0
    %62 = vmatpush2.msra.mxu0 0.0
    %63 = vmatprep.subr.mxu0 0.0
    %64 = vmatpush2.msra.mxu0 0.0
    %65 = vmatprep.subr.mxu0 0.0
    %66 = vmatpush2.msra.mxu0 0.0
    %67 = vmatprep.subr.mxu0 0.0
    %68 = vmatpush2.msra.mxu0 0.0
    %69 = vmatprep.subr.mxu0 0.0
    %70 = vmatpush2.msra.mxu0 0.0
    %71 = vmatprep.subr.mxu0 0.0
    %72 = vmatpush2.msra.mxu0 0.0
    %73 = vmatprep.subr.mxu0 0.0
    %74 = vmatpush2.msra.mxu0 0.0
    %75 = vmatprep.subr.mxu0 0.0
    %76 = vmatpush2.msra.mxu0 0.0
    %77 = vmatprep.subr.mxu0 0.0
    %78 = vmatpush2.msra.mxu0 0.0
    %79 = vmatprep.subr.mxu0 0.0
    %80 = vmatpush2.msra.mxu0 0.0
    %81 = vmatprep.subr.mxu0 0.0
    %82 = vmatpush2.msra.mxu0 0.0
    %83 = vmatprep.subr.mxu0 0.0
    %84 = vmatpush2.msra.mxu0 0.0
    %85 = vmatprep.subr.mxu0 0.0
    %86 = vmatpush2.msra.mxu0 0.0
    %87 = vmatprep.subr.mxu0 0.0
    %88 = vmatpush2.msra.mxu0 0.0
    %89 = vmatprep.subr.mxu0 0.0
    %90 = vmatpush2.msra.mxu0 0.0
    %91 = vmatprep.mubr.f32.mxu0 0.0
    %92 = vmatmul.mubr.f32.gmra.mxu0 %v21
    %v93 = vpop.f32.mrf.mxu0
    %v94 = vadd.f32 0.0, %v93
    %v95 = vpop.f32.mrf.mxu0
    %96 = vdwg.mxu0
    %s97 = scalar_lea.vmem %s0, 2
    %v98 = vld [vmem:[%s97] sm:$0x3]
    %v100 = vsel %vm19, %v98, 0
    %102 = vmatprep.subr.mxu0 0.0
    %103 = vmatpush1.msra.mxu0 0.0
    %104 = vmatprep.subr.mxu0 0.0
    %105 = vmatpush1.msra.mxu0 0.0
    %106 = vmatprep.subr.mxu0 0.0
    %107 = vmatpush1.msra.mxu0 0.0
    %108 = vmatprep.subr.mxu0 0.0
    %109 = vmatpush1.msra.mxu0 0.0
    %110 = vmatprep.subr.mxu0 0.0
    %111 = vmatpush1.msra.mxu0 0.0
    %112 = vmatprep.subr.mxu0 0.0
    %113 = vmatpush1.msra.mxu0 0.0
    %114 = vmatprep.subr.mxu0 0.0
    %115 = vmatpush1.msra.mxu0 0.0
    %116 = vmatprep.subr.mxu0 0.0
    %117 = vmatpush1.msra.mxu0 0.0
    %118 = vmatprep.subr.mxu0 0.0
    %119 = vmatpush1.msra.mxu0 0.0
    %120 = vmatprep.subr.mxu0 0.0
    %121 = vmatpush1.msra.mxu0 0.0
    %122 = vmatprep.subr.mxu0 0.0
    %123 = vmatpush1.msra.mxu0 0.0
    %124 = vmatprep.subr.mxu0 0.0
    %125 = vmatpush1.msra.mxu0 0.0
    %126 = vmatprep.subr.mxu0 0.0
    %127 = vmatpush1.msra.mxu0 0.0
    %128 = vmatprep.subr.mxu0 0.0
    %129 = vmatpush1.msra.mxu0 %v25
    %130 = vmatprep.subr.mxu0 0.0
    %131 = vmatpush1.msra.mxu0 %v16
    %132 = vmatprep.subr.mxu0 0.0
    %133 = vmatpush1.msra.mxu0 %v15
    %134 = vmatprep.subr.mxu0 0.0
    %135 = vmatpush2.msra.mxu0 0.0
    %136 = vmatprep.subr.mxu0 0.0
    %137 = vmatpush2.msra.mxu0 0.0
    %138 = vmatprep.subr.mxu0 0.0
    %139 = vmatpush2.msra.mxu0 0.0
    %140 = vmatprep.subr.mxu0 0.0
    %141 = vmatpush2.msra.mxu0 0.0
    %142 = vmatprep.subr.mxu0 0.0
    %143 = vmatpush2.msra.mxu0 0.0
    %144 = vmatprep.subr.mxu0 0.0
    %145 = vmatpush2.msra.mxu0 0.0
    %146 = vmatprep.subr.mxu0 0.0
    %147 = vmatpush2.msra.mxu0 0.0
    %148 = vmatprep.subr.mxu0 0.0
    %149 = vmatpush2.msra.mxu0 0.0
    %150 = vmatprep.subr.mxu0 0.0
    %151 = vmatpush2.msra.mxu0 0.0
    %152 = vmatprep.subr.mxu0 0.0
    %153 = vmatpush2.msra.mxu0 0.0
    %154 = vmatprep.subr.mxu0 0.0
    %155 = vmatpush2.msra.mxu0 0.0
    %156 = vmatprep.subr.mxu0 0.0
    %157 = vmatpush2.msra.mxu0 0.0
    %158 = vmatprep.subr.mxu0 0.0
    %159 = vmatpush2.msra.mxu0 0.0
    %160 = vmatprep.subr.mxu0 0.0
    %161 = vmatpush2.msra.mxu0 0.0
    %162 = vmatprep.subr.mxu0 0.0
    %163 = vmatpush2.msra.mxu0 0.0
    %164 = vmatprep.subr.mxu0 0.0
    %165 = vmatpush2.msra.mxu0 0.0
    %166 = vmatprep.mubr.f32.mxu0 0.0
    %167 = vmatmul.mubr.f32.gmra.mxu0 %v100
    %v168 = vpop.f32.mrf.mxu0
    %v169 = vadd.f32 0.0, %v168
    %v170 = vpop.f32.mrf.mxu0
    %171 = vdwg.mxu0
    %v172 = vmax.f32 %v94, %v169
    %s173 = scalar_lea.vmem %s0, 4
    %v174 = vld [vmem:[%s173] sm:$0x3]
    %v176 = vsel %vm19, %v174, 0
    %178 = vmatprep.subr.mxu0 0.0
    %179 = vmatpush1.msra.mxu0 0.0
    %180 = vmatprep.subr.mxu0 0.0
    %181 = vmatpush1.msra.mxu0 0.0
    %182 = vmatprep.subr.mxu0 0.0
    %183 = vmatpush1.msra.mxu0 0.0
    %184 = vmatprep.subr.mxu0 0.0
    %185 = vmatpush1.msra.mxu0 0.0
    %186 = vmatprep.subr.mxu0 0.0
    %187 = vmatpush1.msra.mxu0 0.0
    %188 = vmatprep.subr.mxu0 0.0
    %189 = vmatpush1.msra.mxu0 0.0
    %190 = vmatprep.subr.mxu0 0.0
    %191 = vmatpush1.msra.mxu0 0.0
    %192 = vmatprep.subr.mxu0 0.0
    %193 = vmatpush1.msra.mxu0 0.0
    %194 = vmatprep.subr.mxu0 0.0
    %195 = vmatpush1.msra.mxu0 0.0
    %196 = vmatprep.subr.mxu0 0.0
    %197 = vmatpush1.msra.mxu0 0.0
    %198 = vmatprep.subr.mxu0 0.0
    %199 = vmatpush1.msra.mxu0 0.0
    %200 = vmatprep.subr.mxu0 0.0
    %201 = vmatpush1.msra.mxu0 0.0
    %202 = vmatprep.subr.mxu0 0.0
    %203 = vmatpush1.msra.mxu0 0.0
    %204 = vmatprep.subr.mxu0 0.0
    %205 = vmatpush1.msra.mxu0 %v25
    %206 = vmatprep.subr.mxu0 0.0
    %207 = vmatpush1.msra.mxu0 %v16
    %208 = vmatprep.subr.mxu0 0.0
    %209 = vmatpush1.msra.mxu0 %v15
    %210 = vmatprep.subr.mxu0 0.0
    %211 = vmatpush2.msra.mxu0 0.0
    %212 = vmatprep.subr.mxu0 0.0
    %213 = vmatpush2.msra.mxu0 0.0
    %214 = vmatprep.subr.mxu0 0.0
    %215 = vmatpush2.msra.mxu0 0.0
    %216 = vmatprep.subr.mxu0 0.0
    %217 = vmatpush2.msra.mxu0 0.0
    %218 = vmatprep.subr.mxu0 0.0
    %219 = vmatpush2.msra.mxu0 0.0
    %220 = vmatprep.subr.mxu0 0.0
    %221 = vmatpush2.msra.mxu0 0.0
    %222 = vmatprep.subr.mxu0 0.0
    %223 = vmatpush2.msra.mxu0 0.0
    %224 = vmatprep.subr.mxu0 0.0
    %225 = vmatpush2.msra.mxu0 0.0
    %226 = vmatprep.subr.mxu0 0.0
    %227 = vmatpush2.msra.mxu0 0.0
    %228 = vmatprep.subr.mxu0 0.0
    %229 = vmatpush2.msra.mxu0 0.0
    %230 = vmatprep.subr.mxu0 0.0
    %231 = vmatpush2.msra.mxu0 0.0
    %232 = vmatprep.subr.mxu0 0.0
    %233 = vmatpush2.msra.mxu0 0.0
    %234 = vmatprep.subr.mxu0 0.0
    %235 = vmatpush2.msra.mxu0 0.0
    %236 = vmatprep.subr.mxu0 0.0
    %237 = vmatpush2.msra.mxu0 0.0
    %238 = vmatprep.subr.mxu0 0.0
    %239 = vmatpush2.msra.mxu0 0.0
    %240 = vmatprep.subr.mxu0 0.0
    %241 = vmatpush2.msra.mxu0 0.0
    %242 = vmatprep.mubr.f32.mxu0 0.0
    %243 = vmatmul.mubr.f32.gmra.mxu0 %v176
    %v244 = vpop.f32.mrf.mxu0
    %v245 = vadd.f32 0.0, %v244
    %v246 = vpop.f32.mrf.mxu0
    %247 = vdwg.mxu0
    %v248 = vmax.f32 %v172, %v245
    %s249 = scalar_lea.vmem %s0, 6
    %v250 = vld [vmem:[%s249] sm:$0x3]
    %v252 = vsel %vm19, %v250, 0
    %254 = vmatprep.subr.mxu0 0.0
    %255 = vmatpush1.msra.mxu0 0.0
    %256 = vmatprep.subr.mxu0 0.0
    %257 = vmatpush1.msra.mxu0 0.0
    %258 = vmatprep.subr.mxu0 0.0
    %259 = vmatpush1.msra.mxu0 0.0
    %260 = vmatprep.subr.mxu0 0.0
    %261 = vmatpush1.msra.mxu0 0.0
    %262 = vmatprep.subr.mxu0 0.0
    %263 = vmatpush1.msra.mxu0 0.0
    %264 = vmatprep.subr.mxu0 0.0
    %265 = vmatpush1.msra.mxu0 0.0
    %266 = vmatprep.subr.mxu0 0.0
    %267 = vmatpush1.msra.mxu0 0.0
    %268 = vmatprep.subr.mxu0 0.0
    %269 = vmatpush1.msra.mxu0 0.0
    %270 = vmatprep.subr.mxu0 0.0
    %271 = vmatpush1.msra.mxu0 0.0
    %272 = vmatprep.subr.mxu0 0.0
    %273 = vmatpush1.msra.mxu0 0.0
    %274 = vmatprep.subr.mxu0 0.0
    %275 = vmatpush1.msra.mxu0 0.0
    %276 = vmatprep.subr.mxu0 0.0
    %277 = vmatpush1.msra.mxu0 0.0
    %278 = vmatprep.subr.mxu0 0.0
    %279 = vmatpush1.msra.mxu0 0.0
    %280 = vmatprep.subr.mxu0 0.0
    %281 = vmatpush1.msra.mxu0 %v25
    %282 = vmatprep.subr.mxu0 0.0
    %283 = vmatpush1.msra.mxu0 %v16
    %284 = vmatprep.subr.mxu0 0.0
    %285 = vmatpush1.msra.mxu0 %v15
    %286 = vmatprep.subr.mxu0 0.0
    %287 = vmatpush2.msra.mxu0 0.0
    %288 = vmatprep.subr.mxu0 0.0
    %289 = vmatpush2.msra.mxu0 0.0
    %290 = vmatprep.subr.mxu0 0.0
    %291 = vmatpush2.msra.mxu0 0.0
    %292 = vmatprep.subr.mxu0 0.0
    %293 = vmatpush2.msra.mxu0 0.0
    %294 = vmatprep.subr.mxu0 0.0
    %295 = vmatpush2.msra.mxu0 0.0
    %296 = vmatprep.subr.mxu0 0.0
    %297 = vmatpush2.msra.mxu0 0.0
    %298 = vmatprep.subr.mxu0 0.0
    %299 = vmatpush2.msra.mxu0 0.0
    %300 = vmatprep.subr.mxu0 0.0
    %301 = vmatpush2.msra.mxu0 0.0
    %302 = vmatprep.subr.mxu0 0.0
    %303 = vmatpush2.msra.mxu0 0.0
    %304 = vmatprep.subr.mxu0 0.0
    %305 = vmatpush2.msra.mxu0 0.0
    %306 = vmatprep.subr.mxu0 0.0
    %307 = vmatpush2.msra.mxu0 0.0
    %308 = vmatprep.subr.mxu0 0.0
    %309 = vmatpush2.msra.mxu0 0.0
    %310 = vmatprep.subr.mxu0 0.0
    %311 = vmatpush2.msra.mxu0 0.0
    %312 = vmatprep.subr.mxu0 0.0
    %313 = vmatpush2.msra.mxu0 0.0
    %314 = vmatprep.subr.mxu0 0.0
    %315 = vmatpush2.msra.mxu0 0.0
    %316 = vmatprep.subr.mxu0 0.0
    %317 = vmatpush2.msra.mxu0 0.0
    %318 = vmatprep.mubr.f32.mxu0 0.0
    %319 = vmatmul.mubr.f32.gmra.mxu0 %v252
    %v320 = vpop.f32.mrf.mxu0
    %v321 = vadd.f32 0.0, %v320
    %v322 = vpop.f32.mrf.mxu0
    %323 = vdwg.mxu0
    %v324 = vmax.f32 %v248, %v321
    %s325 = scalar_lea.vmem %s0, 8
    %v326 = vld [vmem:[%s325] sm:$0x3]
    %v328 = vsel %vm19, %v326, 0
    %330 = vmatprep.subr.mxu0 0.0
    %331 = vmatpush1.msra.mxu0 0.0
    %332 = vmatprep.subr.mxu0 0.0
    %333 = vmatpush1.msra.mxu0 0.0
    %334 = vmatprep.subr.mxu0 0.0
    %335 = vmatpush1.msra.mxu0 0.0
    %336 = vmatprep.subr.mxu0 0.0
    %337 = vmatpush1.msra.mxu0 0.0
    %338 = vmatprep.subr.mxu0 0.0
    %339 = vmatpush1.msra.mxu0 0.0
    %340 = vmatprep.subr.mxu0 0.0
    %341 = vmatpush1.msra.mxu0 0.0
    %342 = vmatprep.subr.mxu0 0.0
    %343 = vmatpush1.msra.mxu0 0.0
    %344 = vmatprep.subr.mxu0 0.0
    %345 = vmatpush1.msra.mxu0 0.0
    %346 = vmatprep.subr.mxu0 0.0
    %347 = vmatpush1.msra.mxu0 0.0
    %348 = vmatprep.subr.mxu0 0.0
    %349 = vmatpush1.msra.mxu0 0.0
    %350 = vmatprep.subr.mxu0 0.0
    %351 = vmatpush1.msra.mxu0 0.0
    %352 = vmatprep.subr.mxu0 0.0
    %353 = vmatpush1.msra.mxu0 0.0
    %354 = vmatprep.subr.mxu0 0.0
    %355 = vmatpush1.msra.mxu0 0.0
    %356 = vmatprep.subr.mxu0 0.0
    %357 = vmatpush1.msra.mxu0 %v25
    %358 = vmatprep.subr.mxu0 0.0
    %359 = vmatpush1.msra.mxu0 %v16
    %360 = vmatprep.subr.mxu0 0.0
    %361 = vmatpush1.msra.mxu0 %v15
    %362 = vmatprep.subr.mxu0 0.0
    %363 = vmatpush2.msra.mxu0 0.0
    %364 = vmatprep.subr.mxu0 0.0
    %365 = vmatpush2.msra.mxu0 0.0
    %366 = vmatprep.subr.mxu0 0.0
    %367 = vmatpush2.msra.mxu0 0.0
    %368 = vmatprep.subr.mxu0 0.0
    %369 = vmatpush2.msra.mxu0 0.0
    %370 = vmatprep.subr.mxu0 0.0
    %371 = vmatpush2.msra.mxu0 0.0
    %372 = vmatprep.subr.mxu0 0.0
    %373 = vmatpush2.msra.mxu0 0.0
    %374 = vmatprep.subr.mxu0 0.0
    %375 = vmatpush2.msra.mxu0 0.0
    %376 = vmatprep.subr.mxu0 0.0
    %377 = vmatpush2.msra.mxu0 0.0
    %378 = vmatprep.subr.mxu0 0.0
    %379 = vmatpush2.msra.mxu0 0.0
    %380 = vmatprep.subr.mxu0 0.0
    %381 = vmatpush2.msra.mxu0 0.0
    %382 = vmatprep.subr.mxu0 0.0
    %383 = vmatpush2.msra.mxu0 0.0
    %384 = vmatprep.subr.mxu0 0.0
    %385 = vmatpush2.msra.mxu0 0.0
    %386 = vmatprep.subr.mxu0 0.0
    %387 = vmatpush2.msra.mxu0 0.0
    %388 = vmatprep.subr.mxu0 0.0
    %389 = vmatpush2.msra.mxu0 0.0
    %390 = vmatprep.subr.mxu0 0.0
    %391 = vmatpush2.msra.mxu0 0.0
    %392 = vmatprep.subr.mxu0 0.0
    %393 = vmatpush2.msra.mxu0 0.0
    %394 = vmatprep.mubr.f32.mxu0 0.0
    %395 = vmatmul.mubr.f32.gmra.mxu0 %v328
    %v396 = vpop.f32.mrf.mxu0
    %v397 = vadd.f32 0.0, %v396
    %v398 = vpop.f32.mrf.mxu0
    %399 = vdwg.mxu0
    %v400 = vmax.f32 %v324, %v397
    %s401 = scalar_lea.vmem %s0, 10
    %v402 = vld [vmem:[%s401] sm:$0x3]
    %v404 = vsel %vm19, %v402, 0
    %406 = vmatprep.subr.mxu0 0.0
    %407 = vmatpush1.msra.mxu0 0.0
    %408 = vmatprep.subr.mxu0 0.0
    %409 = vmatpush1.msra.mxu0 0.0
    %410 = vmatprep.subr.mxu0 0.0
    %411 = vmatpush1.msra.mxu0 0.0
    %412 = vmatprep.subr.mxu0 0.0
    %413 = vmatpush1.msra.mxu0 0.0
    %414 = vmatprep.subr.mxu0 0.0
    %415 = vmatpush1.msra.mxu0 0.0
    %416 = vmatprep.subr.mxu0 0.0
    %417 = vmatpush1.msra.mxu0 0.0
    %418 = vmatprep.subr.mxu0 0.0
    %419 = vmatpush1.msra.mxu0 0.0
    %420 = vmatprep.subr.mxu0 0.0
    %421 = vmatpush1.msra.mxu0 0.0
    %422 = vmatprep.subr.mxu0 0.0
    %423 = vmatpush1.msra.mxu0 0.0
    %424 = vmatprep.subr.mxu0 0.0
    %425 = vmatpush1.msra.mxu0 0.0
    %426 = vmatprep.subr.mxu0 0.0
    %427 = vmatpush1.msra.mxu0 0.0
    %428 = vmatprep.subr.mxu0 0.0
    %429 = vmatpush1.msra.mxu0 0.0
    %430 = vmatprep.subr.mxu0 0.0
    %431 = vmatpush1.msra.mxu0 0.0
    %432 = vmatprep.subr.mxu0 0.0
    %433 = vmatpush1.msra.mxu0 %v25
    %434 = vmatprep.subr.mxu0 0.0
    %435 = vmatpush1.msra.mxu0 %v16
    %436 = vmatprep.subr.mxu0 0.0
    %437 = vmatpush1.msra.mxu0 %v15
    %438 = vmatprep.subr.mxu0 0.0
    %439 = vmatpush2.msra.mxu0 0.0
    %440 = vmatprep.subr.mxu0 0.0
    %441 = vmatpush2.msra.mxu0 0.0
    %442 = vmatprep.subr.mxu0 0.0
    %443 = vmatpush2.msra.mxu0 0.0
    %444 = vmatprep.subr.mxu0 0.0
    %445 = vmatpush2.msra.mxu0 0.0
    %446 = vmatprep.subr.mxu0 0.0
    %447 = vmatpush2.msra.mxu0 0.0
    %448 = vmatprep.subr.mxu0 0.0
    %449 = vmatpush2.msra.mxu0 0.0
    %450 = vmatprep.subr.mxu0 0.0
    %451 = vmatpush2.msra.mxu0 0.0
    %452 = vmatprep.subr.mxu0 0.0
    %453 = vmatpush2.msra.mxu0 0.0
    %454 = vmatprep.subr.mxu0 0.0
    %455 = vmatpush2.msra.mxu0 0.0
    %456 = vmatprep.subr.mxu0 0.0
    %457 = vmatpush2.msra.mxu0 0.0
    %458 = vmatprep.subr.mxu0 0.0
    %459 = vmatpush2.msra.mxu0 0.0
    %460 = vmatprep.subr.mxu0 0.0
    %461 = vmatpush2.msra.mxu0 0.0
    %462 = vmatprep.subr.mxu0 0.0
    %463 = vmatpush2.msra.mxu0 0.0
    %464 = vmatprep.subr.mxu0 0.0
    %465 = vmatpush2.msra.mxu0 0.0
    %466 = vmatprep.subr.mxu0 0.0
    %467 = vmatpush2.msra.mxu0 0.0
    %468 = vmatprep.subr.mxu0 0.0
    %469 = vmatpush2.msra.mxu0 0.0
    %470 = vmatprep.mubr.f32.mxu0 0.0
    %471 = vmatmul.mubr.f32.gmra.mxu0 %v404
    %v472 = vpop.f32.mrf.mxu0
    %v473 = vadd.f32 0.0, %v472
    %v474 = vpop.f32.mrf.mxu0
    %475 = vdwg.mxu0
    %v476 = vmax.f32 %v400, %v473
    %s477 = scalar_lea.vmem %s0, 12
    %v478 = vld [vmem:[%s477] sm:$0x3]
    %v480 = vsel %vm19, %v478, 0
    %482 = vmatprep.subr.mxu0 0.0
    %483 = vmatpush1.msra.mxu0 0.0
    %484 = vmatprep.subr.mxu0 0.0
    %485 = vmatpush1.msra.mxu0 0.0
    %486 = vmatprep.subr.mxu0 0.0
    %487 = vmatpush1.msra.mxu0 0.0
    %488 = vmatprep.subr.mxu0 0.0
    %489 = vmatpush1.msra.mxu0 0.0
    %490 = vmatprep.subr.mxu0 0.0
    %491 = vmatpush1.msra.mxu0 0.0
    %492 = vmatprep.subr.mxu0 0.0
    %493 = vmatpush1.msra.mxu0 0.0
    %494 = vmatprep.subr.mxu0 0.0
    %495 = vmatpush1.msra.mxu0 0.0
    %496 = vmatprep.subr.mxu0 0.0
    %497 = vmatpush1.msra.mxu0 0.0
    %498 = vmatprep.subr.mxu0 0.0
    %499 = vmatpush1.msra.mxu0 0.0
    %500 = vmatprep.subr.mxu0 0.0
    %501 = vmatpush1.msra.mxu0 0.0
    %502 = vmatprep.subr.mxu0 0.0
    %503 = vmatpush1.msra.mxu0 0.0
    %504 = vmatprep.subr.mxu0 0.0
    %505 = vmatpush1.msra.mxu0 0.0
    %506 = vmatprep.subr.mxu0 0.0
    %507 = vmatpush1.msra.mxu0 0.0
    %508 = vmatprep.subr.mxu0 0.0
    %509 = vmatpush1.msra.mxu0 %v25
    %510 = vmatprep.subr.mxu0 0.0
    %511 = vmatpush1.msra.mxu0 %v16
    %512 = vmatprep.subr.mxu0 0.0
    %513 = vmatpush1.msra.mxu0 %v15
    %514 = vmatprep.subr.mxu0 0.0
    %515 = vmatpush2.msra.mxu0 0.0
    %516 = vmatprep.subr.mxu0 0.0
    %517 = vmatpush2.msra.mxu0 0.0
    %518 = vmatprep.subr.mxu0 0.0
    %519 = vmatpush2.msra.mxu0 0.0
    %520 = vmatprep.subr.mxu0 0.0
    %521 = vmatpush2.msra.mxu0 0.0
    %522 = vmatprep.subr.mxu0 0.0
    %523 = vmatpush2.msra.mxu0 0.0
    %524 = vmatprep.subr.mxu0 0.0
    %525 = vmatpush2.msra.mxu0 0.0
    %526 = vmatprep.subr.mxu0 0.0
    %527 = vmatpush2.msra.mxu0 0.0
    %528 = vmatprep.subr.mxu0 0.0
    %529 = vmatpush2.msra.mxu0 0.0
    %530 = vmatprep.subr.mxu0 0.0
    %531 = vmatpush2.msra.mxu0 0.0
    %532 = vmatprep.subr.mxu0 0.0
    %533 = vmatpush2.msra.mxu0 0.0
    %534 = vmatprep.subr.mxu0 0.0
    %535 = vmatpush2.msra.mxu0 0.0
    %536 = vmatprep.subr.mxu0 0.0
    %537 = vmatpush2.msra.mxu0 0.0
    %538 = vmatprep.subr.mxu0 0.0
    %539 = vmatpush2.msra.mxu0 0.0
    %540 = vmatprep.subr.mxu0 0.0
    %541 = vmatpush2.msra.mxu0 0.0
    %542 = vmatprep.subr.mxu0 0.0
    %543 = vmatpush2.msra.mxu0 0.0
    %544 = vmatprep.subr.mxu0 0.0
    %545 = vmatpush2.msra.mxu0 0.0
    %546 = vmatprep.mubr.f32.mxu0 0.0
    %547 = vmatmul.mubr.f32.gmra.mxu0 %v480
    %v548 = vpop.f32.mrf.mxu0
    %v549 = vadd.f32 0.0, %v548
    %v550 = vpop.f32.mrf.mxu0
    %551 = vdwg.mxu0
    %v552 = vmax.f32 %v476, %v549
    %s553 = scalar_lea.vmem %s0, 14
    %v554 = vld [vmem:[%s553] sm:$0x3]
    %v556 = vsel %vm19, %v554, 0
    %558 = vmatprep.subr.mxu0 0.0
    %559 = vmatpush1.msra.mxu0 0.0
    %560 = vmatprep.subr.mxu0 0.0
    %561 = vmatpush1.msra.mxu0 0.0
    %562 = vmatprep.subr.mxu0 0.0
    %563 = vmatpush1.msra.mxu0 0.0
    %564 = vmatprep.subr.mxu0 0.0
    %565 = vmatpush1.msra.mxu0 0.0
    %566 = vmatprep.subr.mxu0 0.0
    %567 = vmatpush1.msra.mxu0 0.0
    %568 = vmatprep.subr.mxu0 0.0
    %569 = vmatpush1.msra.mxu0 0.0
    %570 = vmatprep.subr.mxu0 0.0
    %571 = vmatpush1.msra.mxu0 0.0
    %572 = vmatprep.subr.mxu0 0.0
    %573 = vmatpush1.msra.mxu0 0.0
    %574 = vmatprep.subr.mxu0 0.0
    %575 = vmatpush1.msra.mxu0 0.0
    %576 = vmatprep.subr.mxu0 0.0
    %577 = vmatpush1.msra.mxu0 0.0
    %578 = vmatprep.subr.mxu0 0.0
    %579 = vmatpush1.msra.mxu0 0.0
    %580 = vmatprep.subr.mxu0 0.0
    %581 = vmatpush1.msra.mxu0 0.0
    %582 = vmatprep.subr.mxu0 0.0
    %583 = vmatpush1.msra.mxu0 0.0
    %584 = vmatprep.subr.mxu0 0.0
    %585 = vmatpush1.msra.mxu0 %v25
    %586 = vmatprep.subr.mxu0 0.0
    %587 = vmatpush1.msra.mxu0 %v16
    %588 = vmatprep.subr.mxu0 0.0
    %589 = vmatpush1.msra.mxu0 %v15
    %590 = vmatprep.subr.mxu0 0.0
    %591 = vmatpush2.msra.mxu0 0.0
    %592 = vmatprep.subr.mxu0 0.0
    %593 = vmatpush2.msra.mxu0 0.0
    %594 = vmatprep.subr.mxu0 0.0
    %595 = vmatpush2.msra.mxu0 0.0
    %596 = vmatprep.subr.mxu0 0.0
    %597 = vmatpush2.msra.mxu0 0.0
    %598 = vmatprep.subr.mxu0 0.0
    %599 = vmatpush2.msra.mxu0 0.0
    %600 = vmatprep.subr.mxu0 0.0
    %601 = vmatpush2.msra.mxu0 0.0
    %602 = vmatprep.subr.mxu0 0.0
    %603 = vmatpush2.msra.mxu0 0.0
    %604 = vmatprep.subr.mxu0 0.0
    %605 = vmatpush2.msra.mxu0 0.0
    %606 = vmatprep.subr.mxu0 0.0
    %607 = vmatpush2.msra.mxu0 0.0
    %608 = vmatprep.subr.mxu0 0.0
    %609 = vmatpush2.msra.mxu0 0.0
    %610 = vmatprep.subr.mxu0 0.0
    %611 = vmatpush2.msra.mxu0 0.0
    %612 = vmatprep.subr.mxu0 0.0
    %613 = vmatpush2.msra.mxu0 0.0
    %614 = vmatprep.subr.mxu0 0.0
    %615 = vmatpush2.msra.mxu0 0.0
    %616 = vmatprep.subr.mxu0 0.0
    %617 = vmatpush2.msra.mxu0 0.0
    %618 = vmatprep.subr.mxu0 0.0
    %619 = vmatpush2.msra.mxu0 0.0
    %620 = vmatprep.subr.mxu0 0.0
    %621 = vmatpush2.msra.mxu0 0.0
    %622 = vmatprep.mubr.f32.mxu0 0.0
    %623 = vmatmul.mubr.f32.gmra.mxu0 %v556
    %v624 = vpop.f32.mrf.mxu0
    %v625 = vadd.f32 0.0, %v624
    %v626 = vpop.f32.mrf.mxu0
    %627 = vdwg.mxu0
    %v628 = vmax.f32 %v552, %v625
    %s629 = scalar_lea.vmem %s0, 16
    %v630 = vld [vmem:[%s629] sm:$0x3]
    %v632 = vsel %vm19, %v630, 0
    %634 = vmatprep.subr.mxu0 0.0
    %635 = vmatpush1.msra.mxu0 0.0
    %636 = vmatprep.subr.mxu0 0.0
    %637 = vmatpush1.msra.mxu0 0.0
    %638 = vmatprep.subr.mxu0 0.0
    %639 = vmatpush1.msra.mxu0 0.0
    %640 = vmatprep.subr.mxu0 0.0
    %641 = vmatpush1.msra.mxu0 0.0
    %642 = vmatprep.subr.mxu0 0.0
    %643 = vmatpush1.msra.mxu0 0.0
    %644 = vmatprep.subr.mxu0 0.0
    %645 = vmatpush1.msra.mxu0 0.0
    %646 = vmatprep.subr.mxu0 0.0
    %647 = vmatpush1.msra.mxu0 0.0
    %648 = vmatprep.subr.mxu0 0.0
    %649 = vmatpush1.msra.mxu0 0.0
    %650 = vmatprep.subr.mxu0 0.0
    %651 = vmatpush1.msra.mxu0 0.0
    %652 = vmatprep.subr.mxu0 0.0
    %653 = vmatpush1.msra.mxu0 0.0
    %654 = vmatprep.subr.mxu0 0.0
    %655 = vmatpush1.msra.mxu0 0.0
    %656 = vmatprep.subr.mxu0 0.0
    %657 = vmatpush1.msra.mxu0 0.0
    %658 = vmatprep.subr.mxu0 0.0
    %659 = vmatpush1.msra.mxu0 0.0
    %660 = vmatprep.subr.mxu0 0.0
    %661 = vmatpush1.msra.mxu0 %v25
    %662 = vmatprep.subr.mxu0 0.0
    %663 = vmatpush1.msra.mxu0 %v16
    %664 = vmatprep.subr.mxu0 0.0
    %665 = vmatpush1.msra.mxu0 %v15
    %666 = vmatprep.subr.mxu0 0.0
    %667 = vmatpush2.msra.mxu0 0.0
    %668 = vmatprep.subr.mxu0 0.0
    %669 = vmatpush2.msra.mxu0 0.0
    %670 = vmatprep.subr.mxu0 0.0
    %671 = vmatpush2.msra.mxu0 0.0
    %672 = vmatprep.subr.mxu0 0.0
    %673 = vmatpush2.msra.mxu0 0.0
    %674 = vmatprep.subr.mxu0 0.0
    %675 = vmatpush2.msra.mxu0 0.0
    %676 = vmatprep.subr.mxu0 0.0
    %677 = vmatpush2.msra.mxu0 0.0
    %678 = vmatprep.subr.mxu0 0.0
    %679 = vmatpush2.msra.mxu0 0.0
    %680 = vmatprep.subr.mxu0 0.0
    %681 = vmatpush2.msra.mxu0 0.0
    %682 = vmatprep.subr.mxu0 0.0
    %683 = vmatpush2.msra.mxu0 0.0
    %684 = vmatprep.subr.mxu0 0.0
    %685 = vmatpush2.msra.mxu0 0.0
    %686 = vmatprep.subr.mxu0 0.0
    %687 = vmatpush2.msra.mxu0 0.0
    %688 = vmatprep.subr.mxu0 0.0
    %689 = vmatpush2.msra.mxu0 0.0
    %690 = vmatprep.subr.mxu0 0.0
    %691 = vmatpush2.msra.mxu0 0.0
    %692 = vmatprep.subr.mxu0 0.0
    %693 = vmatpush2.msra.mxu0 0.0
    %694 = vmatprep.subr.mxu0 0.0
    %695 = vmatpush2.msra.mxu0 0.0
    %696 = vmatprep.subr.mxu0 0.0
    %697 = vmatpush2.msra.mxu0 0.0
    %698 = vmatprep.mubr.f32.mxu0 0.0
    %699 = vmatmul.mubr.f32.gmra.mxu0 %v632
    %v700 = vpop.f32.mrf.mxu0
    %v701 = vadd.f32 0.0, %v700
    %v702 = vpop.f32.mrf.mxu0
    %703 = vdwg.mxu0
    %v704 = vmax.f32 %v628, %v701
    %s705 = scalar_lea.vmem %s0, 18
    %v706 = vld [vmem:[%s705] sm:$0x3]
    %v708 = vsel %vm19, %v706, 0
    %710 = vmatprep.subr.mxu0 0.0
    %711 = vmatpush1.msra.mxu0 0.0
    %712 = vmatprep.subr.mxu0 0.0
    %713 = vmatpush1.msra.mxu0 0.0
    %714 = vmatprep.subr.mxu0 0.0
    %715 = vmatpush1.msra.mxu0 0.0
    %716 = vmatprep.subr.mxu0 0.0
    %717 = vmatpush1.msra.mxu0 0.0
    %718 = vmatprep.subr.mxu0 0.0
    %719 = vmatpush1.msra.mxu0 0.0
    %720 = vmatprep.subr.mxu0 0.0
    %721 = vmatpush1.msra.mxu0 0.0
    %722 = vmatprep.subr.mxu0 0.0
    %723 = vmatpush1.msra.mxu0 0.0
    %724 = vmatprep.subr.mxu0 0.0
    %725 = vmatpush1.msra.mxu0 0.0
    %726 = vmatprep.subr.mxu0 0.0
    %727 = vmatpush1.msra.mxu0 0.0
    %728 = vmatprep.subr.mxu0 0.0
    %729 = vmatpush1.msra.mxu0 0.0
    %730 = vmatprep.subr.mxu0 0.0
    %731 = vmatpush1.msra.mxu0 0.0
    %732 = vmatprep.subr.mxu0 0.0
    %733 = vmatpush1.msra.mxu0 0.0
    %734 = vmatprep.subr.mxu0 0.0
    %735 = vmatpush1.msra.mxu0 0.0
    %736 = vmatprep.subr.mxu0 0.0
    %737 = vmatpush1.msra.mxu0 %v25
    %738 = vmatprep.subr.mxu0 0.0
    %739 = vmatpush1.msra.mxu0 %v16
    %740 = vmatprep.subr.mxu0 0.0
    %741 = vmatpush1.msra.mxu0 %v15
    %742 = vmatprep.subr.mxu0 0.0
    %743 = vmatpush2.msra.mxu0 0.0
    %744 = vmatprep.subr.mxu0 0.0
    %745 = vmatpush2.msra.mxu0 0.0
    %746 = vmatprep.subr.mxu0 0.0
    %747 = vmatpush2.msra.mxu0 0.0
    %748 = vmatprep.subr.mxu0 0.0
    %749 = vmatpush2.msra.mxu0 0.0
    %750 = vmatprep.subr.mxu0 0.0
    %751 = vmatpush2.msra.mxu0 0.0
    %752 = vmatprep.subr.mxu0 0.0
    %753 = vmatpush2.msra.mxu0 0.0
    %754 = vmatprep.subr.mxu0 0.0
    %755 = vmatpush2.msra.mxu0 0.0
    %756 = vmatprep.subr.mxu0 0.0
    %757 = vmatpush2.msra.mxu0 0.0
    %758 = vmatprep.subr.mxu0 0.0
    %759 = vmatpush2.msra.mxu0 0.0
    %760 = vmatprep.subr.mxu0 0.0
    %761 = vmatpush2.msra.mxu0 0.0
    %762 = vmatprep.subr.mxu0 0.0
    %763 = vmatpush2.msra.mxu0 0.0
    %764 = vmatprep.subr.mxu0 0.0
    %765 = vmatpush2.msra.mxu0 0.0
    %766 = vmatprep.subr.mxu0 0.0
    %767 = vmatpush2.msra.mxu0 0.0
    %768 = vmatprep.subr.mxu0 0.0
    %769 = vmatpush2.msra.mxu0 0.0
    %770 = vmatprep.subr.mxu0 0.0
    %771 = vmatpush2.msra.mxu0 0.0
    %772 = vmatprep.subr.mxu0 0.0
    %773 = vmatpush2.msra.mxu0 0.0
    %774 = vmatprep.mubr.f32.mxu0 0.0
    %775 = vmatmul.mubr.f32.gmra.mxu0 %v708
    %v776 = vpop.f32.mrf.mxu0
    %v777 = vadd.f32 0.0, %v776
    %v778 = vpop.f32.mrf.mxu0
    %779 = vdwg.mxu0
    %v780 = vmax.f32 %v704, %v777
    %s781 = scalar_lea.vmem %s0, 20
    %v782 = vld [vmem:[%s781] sm:$0x3]
    %v784 = vsel %vm19, %v782, 0
    %786 = vmatprep.subr.mxu0 0.0
    %787 = vmatpush1.msra.mxu0 0.0
    %788 = vmatprep.subr.mxu0 0.0
    %789 = vmatpush1.msra.mxu0 0.0
    %790 = vmatprep.subr.mxu0 0.0
    %791 = vmatpush1.msra.mxu0 0.0
    %792 = vmatprep.subr.mxu0 0.0
    %793 = vmatpush1.msra.mxu0 0.0
    %794 = vmatprep.subr.mxu0 0.0
    %795 = vmatpush1.msra.mxu0 0.0
    %796 = vmatprep.subr.mxu0 0.0
    %797 = vmatpush1.msra.mxu0 0.0
    %798 = vmatprep.subr.mxu0 0.0
    %799 = vmatpush1.msra.mxu0 0.0
    %800 = vmatprep.subr.mxu0 0.0
    %801 = vmatpush1.msra.mxu0 0.0
    %802 = vmatprep.subr.mxu0 0.0
    %803 = vmatpush1.msra.mxu0 0.0
    %804 = vmatprep.subr.mxu0 0.0
    %805 = vmatpush1.msra.mxu0 0.0
    %806 = vmatprep.subr.mxu0 0.0
    %807 = vmatpush1.msra.mxu0 0.0
    %808 = vmatprep.subr.mxu0 0.0
    %809 = vmatpush1.msra.mxu0 0.0
    %810 = vmatprep.subr.mxu0 0.0
    %811 = vmatpush1.msra.mxu0 0.0
    %812 = vmatprep.subr.mxu0 0.0
    %813 = vmatpush1.msra.mxu0 %v25
    %814 = vmatprep.subr.mxu0 0.0
    %815 = vmatpush1.msra.mxu0 %v16
    %816 = vmatprep.subr.mxu0 0.0
    %817 = vmatpush1.msra.mxu0 %v15
    %818 = vmatprep.subr.mxu0 0.0
    %819 = vmatpush2.msra.mxu0 0.0
    %820 = vmatprep.subr.mxu0 0.0
    %821 = vmatpush2.msra.mxu0 0.0
    %822 = vmatprep.subr.mxu0 0.0
    %823 = vmatpush2.msra.mxu0 0.0
    %824 = vmatprep.subr.mxu0 0.0
    %825 = vmatpush2.msra.mxu0 0.0
    %826 = vmatprep.subr.mxu0 0.0
    %827 = vmatpush2.msra.mxu0 0.0
    %828 = vmatprep.subr.mxu0 0.0
    %829 = vmatpush2.msra.mxu0 0.0
    %830 = vmatprep.subr.mxu0 0.0
    %831 = vmatpush2.msra.mxu0 0.0
    %832 = vmatprep.subr.mxu0 0.0
    %833 = vmatpush2.msra.mxu0 0.0
    %834 = vmatprep.subr.mxu0 0.0
    %835 = vmatpush2.msra.mxu0 0.0
    %836 = vmatprep.subr.mxu0 0.0
    %837 = vmatpush2.msra.mxu0 0.0
    %838 = vmatprep.subr.mxu0 0.0
    %839 = vmatpush2.msra.mxu0 0.0
    %840 = vmatprep.subr.mxu0 0.0
    %841 = vmatpush2.msra.mxu0 0.0
    %842 = vmatprep.subr.mxu0 0.0
    %843 = vmatpush2.msra.mxu0 0.0
    %844 = vmatprep.subr.mxu0 0.0
    %845 = vmatpush2.msra.mxu0 0.0
    %846 = vmatprep.subr.mxu0 0.0
    %847 = vmatpush2.msra.mxu0 0.0
    %848 = vmatprep.subr.mxu0 0.0
    %849 = vmatpush2.msra.mxu0 0.0
    %850 = vmatprep.mubr.f32.mxu0 0.0
    %851 = vmatmul.mubr.f32.gmra.mxu0 %v784
    %v852 = vpop.f32.mrf.mxu0
    %v853 = vadd.f32 0.0, %v852
    %v854 = vpop.f32.mrf.mxu0
    %855 = vdwg.mxu0
    %v856 = vmax.f32 %v780, %v853
    %s857 = scalar_lea.vmem %s0, 22
    %v858 = vld [vmem:[%s857] sm:$0x3]
    %v860 = vsel %vm19, %v858, 0
    %862 = vmatprep.subr.mxu0 0.0
    %863 = vmatpush1.msra.mxu0 0.0
    %864 = vmatprep.subr.mxu0 0.0
    %865 = vmatpush1.msra.mxu0 0.0
    %866 = vmatprep.subr.mxu0 0.0
    %867 = vmatpush1.msra.mxu0 0.0
    %868 = vmatprep.subr.mxu0 0.0
    %869 = vmatpush1.msra.mxu0 0.0
    %870 = vmatprep.subr.mxu0 0.0
    %871 = vmatpush1.msra.mxu0 0.0
    %872 = vmatprep.subr.mxu0 0.0
    %873 = vmatpush1.msra.mxu0 0.0
    %874 = vmatprep.subr.mxu0 0.0
    %875 = vmatpush1.msra.mxu0 0.0
    %876 = vmatprep.subr.mxu0 0.0
    %877 = vmatpush1.msra.mxu0 0.0
    %878 = vmatprep.subr.mxu0 0.0
    %879 = vmatpush1.msra.mxu0 0.0
    %880 = vmatprep.subr.mxu0 0.0
    %881 = vmatpush1.msra.mxu0 0.0
    %882 = vmatprep.subr.mxu0 0.0
    %883 = vmatpush1.msra.mxu0 0.0
    %884 = vmatprep.subr.mxu0 0.0
    %885 = vmatpush1.msra.mxu0 0.0
    %886 = vmatprep.subr.mxu0 0.0
    %887 = vmatpush1.msra.mxu0 0.0
    %888 = vmatprep.subr.mxu0 0.0
    %889 = vmatpush1.msra.mxu0 %v25
    %890 = vmatprep.subr.mxu0 0.0
    %891 = vmatpush1.msra.mxu0 %v16
    %892 = vmatprep.subr.mxu0 0.0
    %893 = vmatpush1.msra.mxu0 %v15
    %894 = vmatprep.subr.mxu0 0.0
    %895 = vmatpush2.msra.mxu0 0.0
    %896 = vmatprep.subr.mxu0 0.0
    %897 = vmatpush2.msra.mxu0 0.0
    %898 = vmatprep.subr.mxu0 0.0
    %899 = vmatpush2.msra.mxu0 0.0
    %900 = vmatprep.subr.mxu0 0.0
    %901 = vmatpush2.msra.mxu0 0.0
    %902 = vmatprep.subr.mxu0 0.0
    %903 = vmatpush2.msra.mxu0 0.0
    %904 = vmatprep.subr.mxu0 0.0
    %905 = vmatpush2.msra.mxu0 0.0
    %906 = vmatprep.subr.mxu0 0.0
    %907 = vmatpush2.msra.mxu0 0.0
    %908 = vmatprep.subr.mxu0 0.0
    %909 = vmatpush2.msra.mxu0 0.0
    %910 = vmatprep.subr.mxu0 0.0
    %911 = vmatpush2.msra.mxu0 0.0
    %912 = vmatprep.subr.mxu0 0.0
    %913 = vmatpush2.msra.mxu0 0.0
    %914 = vmatprep.subr.mxu0 0.0
    %915 = vmatpush2.msra.mxu0 0.0
    %916 = vmatprep.subr.mxu0 0.0
    %917 = vmatpush2.msra.mxu0 0.0
    %918 = vmatprep.subr.mxu0 0.0
    %919 = vmatpush2.msra.mxu0 0.0
    %920 = vmatprep.subr.mxu0 0.0
    %921 = vmatpush2.msra.mxu0 0.0
    %922 = vmatprep.subr.mxu0 0.0
    %923 = vmatpush2.msra.mxu0 0.0
    %924 = vmatprep.subr.mxu0 0.0
    %925 = vmatpush2.msra.mxu0 0.0
    %926 = vmatprep.mubr.f32.mxu0 0.0
    %927 = vmatmul.mubr.f32.gmra.mxu0 %v860
    %v928 = vpop.f32.mrf.mxu0
    %v929 = vadd.f32 0.0, %v928
    %v930 = vpop.f32.mrf.mxu0
    %931 = vdwg.mxu0
    %v932 = vmax.f32 %v856, %v929
    %v933 = vld [vmem:[%s2] sm:$0x1]
    %v935 = vlaneseq
    %v936 = vshrl.u32 %v935, 7
    %v937 = vsub.s32 0, %v936
    %v938 = vrot.slane %v933, %v937
    %v940 = vadd.f32 %v932, %v938
    %v941 = vmax.f32 %v940, 0.0
    %vm942 = vcmask 58368
    %943 = vst.msk [vmem:[#allocation2] sm:$0x3] %vm942, %v941
    // Predicated region
    $region14: #{cnn_forward.1} parent=1 // pred_check
      _
    $region15: #{cnn_forward.1} parent=1 // pred_check_branch
      %945 = sbr.rel (0) target = $region17
    $region16: #{cnn_forward.1} parent=1 // pred_region
      %s947 = ssub.s32 32, 32
      %948 = vsyncadd [#allocation3], %s947
      %s950 = sshll.u32 [#allocation2], 4
      %s951 = int_to_ptr.vmem [resolvable:$true] %s950
      %953 = dma.vmem_to_hbm [thread:$0]  %s951, 32, %s3, [#allocation3]
    $region17: #{cnn_forward.1} parent=1 // pred_fallthru
      _
    // Predicated region
    $region18: #{cnn_forward.1} parent=1 // pred_check
      _
    $region19: #{cnn_forward.1} parent=1 // pred_check_branch
      %955 = sbr.rel (0) target = $region21
    $region20: #{cnn_forward.1} parent=1 // pred_region
      %956 = dma.done [#allocation3], 32
    $region21: #{cnn_forward.1} parent=1 // pred_fallthru
      _
    %957 = vsyncpa [#allocation3], 1

</llo_original>
